<compile_context>
chip_gen: v7x
topology: tpu7x:2x2x1
jax: 0.10.0
libtpu: 0.0.40
codegen_flags: <defaults>
</compile_context>

<pallas_src>
import jax
import jax.numpy as jnp
from jax.experimental import pallas as pl
from jax.experimental.pallas import tpu as pltpu


def _round_up(a, b):
    return pl.cdiv(a, b) * b


def _mlp_kernel(x_ref, w1_ref, b1_ref, w2_ref, b2_ref, o_ref):
    # x_ref/o_ref: [BB, D, TN]; weights in PyTorch Conv2d (out, in) layout.
    # Hoist the (tiny, 32x32) weight loads/casts out of the per-row loop.
    w1 = w1_ref[...].astype(jnp.float32)          # [H, D]
    w2 = w2_ref[...].astype(jnp.float32)          # [H, H]
    b1 = b1_ref[...]                              # [H, 1] f32
    b2 = b2_ref[...]                              # [H, 1] f32
    bb = x_ref.shape[0]                           # static, small (<= ~16)
    for b in range(bb):
        x = x_ref[b].astype(jnp.float32)          # [D, TN] lane-dense
        h = jnp.dot(w1, x, preferred_element_type=jnp.float32) + b1
        h = jnp.maximum(h, 0.0)                   # ReLU; dropout p=0.15 == identity (eval)
        o = jnp.dot(w2, h, preferred_element_type=jnp.float32)
        o_ref[b] = (o + b2 + x).astype(o_ref.dtype)   # residual link


def _choose_tiling(B, D, NL, itemsize, tile_n):
    """Pick (batch block BB, column tile) targeting ~1 MiB of input per step."""
    nl128 = _round_up(NL, 128)
    tile_n = min(max(128, _round_up(tile_n, 128)), nl128)

    target = 1 << 20          # ~1 MiB / step amortizes the ~0.35us step overhead
    floor = 256 << 10         # never shrink below ~256 KiB/step chasing step count

    bb = 1
    if tile_n >= nl128:       # whole spatial axis fits in one tile -> block batch rows
        per_batch = D * nl128 * itemsize
        bb = int(min(B, max(1, target // max(per_batch, 1))))

    def nsteps(bb_, tn_):
        return pl.cdiv(B, bb_) * pl.cdiv(NL, tn_)

    def step_bytes(bb_, tn_):
        return bb_ * D * tn_ * itemsize

    # Keep >= 4 grid steps (double-buffering; v7x's 2 TensorCores) when possible
    # without dropping below the per-step byte floor.
    while nsteps(bb, tile_n) < 4:
        if bb > 1 and step_bytes(bb // 2, tile_n) >= floor:
            bb //= 2
        elif tile_n > 128 and step_bytes(bb, _round_up(max(tile_n // 2, 128), 128)) >= floor:
            tile_n = _round_up(max(tile_n // 2, 128), 128)
        else:
            break
    return bb, tile_n


def mlp_forward(x, w1, b1, w2, b2, *, tile_n=8192):
    """STID MLP forward.

    x:      [B, D, N, L] (NCHW; L is typically 1 in STID) or [B, D, N]
    w1:     [H, D]   PyTorch Conv2d(1x1) weight layout (out, in)
    w2:     [H, H]
    b1, b2: [H]
    """
    orig_ndim = x.ndim
    if x.ndim == 3:
        x = x[..., None]
    B, D, N, L = x.shape
    H = w1.shape[0]
    assert w1.shape == (H, D) and w2.shape == (H, H)
    assert H == D, "residual link requires hidden_dim == input_dim"

    NL = N * L
    itemsize = jnp.dtype(x.dtype).itemsize
    bb, tile_n = _choose_tiling(B, D, NL, itemsize, tile_n)

    # Layout-preserving reshape (fold L into N). No pad, no copy, no slice:
    # ragged last column tile is handled by Pallas partial-block masking.
    x3 = x.reshape(B, D, NL)
    b1_2d = b1.reshape(H, 1).astype(jnp.float32)
    b2_2d = b2.reshape(H, 1).astype(jnp.float32)

    grid = (pl.cdiv(B, bb), pl.cdiv(NL, tile_n))

    # VMEM estimate: double-buffered in/out activation tiles + f32 temporaries
    # (x, h, o) + resident weights. Only pass an explicit limit if we exceed the
    # most conservative default scoped limit (16 MiB on v5e).
    step_io = bb * D * tile_n * itemsize
    est = 2 * 2 * step_io + 3 * bb * D * tile_n * 4 + (H * D + H * H + 2 * H) * 4
    vmem_limit = int(min(est * 3 // 2, 64 << 20)) if est > (16 << 20) else None

    out3 = pl.pallas_call(
        _mlp_kernel,
        out_shape=jax.ShapeDtypeStruct((B, H, NL), x.dtype),
        grid_spec=pltpu.PrefetchScalarGridSpec(
            num_scalar_prefetch=0,
            grid=grid,
            in_specs=[
                pl.BlockSpec((bb, D, tile_n), lambda b, j: (b, 0, j)),  # x tile
                pl.BlockSpec((H, D), lambda b, j: (0, 0)),              # W1 (resident)
                pl.BlockSpec((H, 1), lambda b, j: (0, 0)),              # b1
                pl.BlockSpec((H, H), lambda b, j: (0, 0)),              # W2 (resident)
                pl.BlockSpec((H, 1), lambda b, j: (0, 0)),              # b2
            ],
            out_specs=pl.BlockSpec((bb, H, tile_n), lambda b, j: (b, 0, j)),
        ),
        compiler_params=pltpu.CompilerParams(
            dimension_semantics=("parallel", "parallel"),
            vmem_limit_bytes=vmem_limit),
    )(x3, w1, b1_2d, w2, b2_2d)

    out = out3.reshape(B, H, N, L)
    if orig_ndim == 3:
        out = out[..., 0]
    return out


def reference_forward(x_nchw, w1, b1, w2, b2):
    """Pure-JAX reference matching the PyTorch module in eval mode."""
    B, D, N, L = x_nchw.shape
    x3 = x_nchw.reshape(B, D, N * L).astype(jnp.float32)
    h = jnp.einsum("hd,bdn->bhn", w1, x3,
                   precision=jax.lax.Precision.HIGHEST) + b1[None, :, None]
    h = jnp.maximum(h, 0.0)
    o = jnp.einsum("gh,bhn->bgn", w2, h,
                   precision=jax.lax.Precision.HIGHEST) + b2[None, :, None] + x3
    return o.reshape(B, -1, N, L)


if __name__ == "__main__":
    # STID-style shapes: [B, D, N, 1] with D = hidden_dim, N = num_nodes.
    # N = 307 is intentionally not 128-aligned to exercise the ragged tail.
    B, D, N, L = 2, 32, 307, 1
    H = D

    key = jax.random.PRNGKey(0)
    kx, kw1, kb1, kw2, kb2 = jax.random.split(key, 5)

    x = jax.random.normal(kx, (B, D, N, L), dtype=jnp.float32)

    # Conv2d(1x1) weights in PyTorch (out, in) layout.
    bound1 = 1.0 / (D ** 0.5)
    w1 = jax.random.uniform(kw1, (H, D), jnp.float32, -bound1, bound1)
    b1 = jax.random.uniform(kb1, (H,), jnp.float32, -bound1, bound1)
    bound2 = 1.0 / (H ** 0.5)
    w2 = jax.random.uniform(kw2, (H, H), jnp.float32, -bound2, bound2)
    b2 = jax.random.uniform(kb2, (H,), jnp.float32, -bound2, bound2)

    # f32 path: exact-ish match with the HIGHEST-precision reference.
    out = jax.block_until_ready(mlp_forward(x, w1, b1, w2, b2))
    ref = reference_forward(x, w1, b1, w2, b2)
    assert out.shape == (B, H, N, L)
    assert jnp.allclose(out, ref, atol=1e-5, rtol=1e-5)

    # bf16 activation path (halves HBM traffic for this memory-bound op):
    # kernel computes in f32 internally, only I/O rounding differs.
    x_bf16 = x.astype(jnp.bfloat16)
    out_bf16 = jax.block_until_ready(mlp_forward(x_bf16, w1, b1, w2, b2))
    ref_bf16 = reference_forward(x_bf16.astype(jnp.float32), w1, b1, w2, b2)
    assert out_bf16.dtype == jnp.bfloat16
    assert jnp.allclose(out_bf16.astype(jnp.float32), ref_bf16, atol=5e-2, rtol=5e-2)

    print("KERNEL_OK")
</pallas_src>

<mosaic_0001>
module attributes {stable_mosaic.version = 11 : i64} {
  func.func @_mlp_kernel(%arg0: i32, %arg1: i32, %arg2: memref<2x32x384xf32, #tpu.memory_space<vmem>>, %arg3: memref<32x32xf32, #tpu.memory_space<vmem>>, %arg4: memref<32x1xf32, #tpu.memory_space<vmem>>, %arg5: memref<32x32xf32, #tpu.memory_space<vmem>>, %arg6: memref<32x1xf32, #tpu.memory_space<vmem>>, %arg7: memref<2x32x384xf32, #tpu.memory_space<vmem>>) attributes {dimension_semantics = [#tpu.dimension_semantics<parallel>, #tpu.dimension_semantics<parallel>], iteration_bounds = array<i64: 1, 1>, scalar_prefetch = 0 : i64, scratch_operands = 0 : i64, tpu.core_type = #tpu.core_type<tc>, window_params = [{transform_indices = @transform_0, window_bounds = array<i64: 2, 32, 384>}, {pipeline_mode = #tpu.pipeline_mode<synchronous>, transform_indices = @transform_1, window_bounds = array<i64: 32, 32>}, {pipeline_mode = #tpu.pipeline_mode<synchronous>, transform_indices = @transform_2, window_bounds = array<i64: 32, 1>}, {pipeline_mode = #tpu.pipeline_mode<synchronous>, transform_indices = @transform_3, window_bounds = array<i64: 32, 32>}, {pipeline_mode = #tpu.pipeline_mode<synchronous>, transform_indices = @transform_4, window_bounds = array<i64: 32, 1>}, {transform_indices = @transform_5, window_bounds = array<i64: 2, 32, 384>}]} {
    %c0 = arith.constant 0 : index
    %c0_0 = arith.constant 0 : index
    %0 = vector.load %arg3[%c0, %c0_0] : memref<32x32xf32, #tpu.memory_space<vmem>>, vector<32x32xf32>
    %c0_1 = arith.constant 0 : index
    %c0_2 = arith.constant 0 : index
    %1 = vector.load %arg5[%c0_1, %c0_2] : memref<32x32xf32, #tpu.memory_space<vmem>>, vector<32x32xf32>
    %c0_3 = arith.constant 0 : index
    %c0_4 = arith.constant 0 : index
    %2 = vector.load %arg4[%c0_3, %c0_4] : memref<32x1xf32, #tpu.memory_space<vmem>>, vector<32x1xf32>
    %c0_5 = arith.constant 0 : index
    %c0_6 = arith.constant 0 : index
    %3 = vector.load %arg6[%c0_5, %c0_6] : memref<32x1xf32, #tpu.memory_space<vmem>>, vector<32x1xf32>
    %c0_7 = arith.constant 0 : index
    %c0_8 = arith.constant 0 : index
    %c0_9 = arith.constant 0 : index
    %4 = vector.load %arg2[%c0_7, %c0_8, %c0_9] : memref<2x32x384xf32, #tpu.memory_space<vmem>>, vector<1x32x384xf32>
    %5 = vector.shape_cast %4 : vector<1x32x384xf32> to vector<32x384xf32>
    %cst = arith.constant dense<0.000000e+00> : vector<32x384xf32>
    %6 = tpu.matmul %0, %5, %cst {dimension_numbers = #tpu.dot_dimension_numbers<[1], [0], [0], [1], [0, 0, 1, 1], [], []>} : vector<32x32xf32>, vector<32x384xf32>, vector<32x384xf32> -> vector<32x384xf32>
    %7 = vector.broadcast %2 : vector<32x1xf32> to vector<32x384xf32>
    %8 = arith.addf %6, %7 : vector<32x384xf32>
    %cst_10 = arith.constant 0.000000e+00 : f32
    %9 = vector.broadcast %cst_10 : f32 to vector<32x384xf32>
    %10 = arith.maximumf %8, %9 : vector<32x384xf32>
    %cst_11 = arith.constant dense<0.000000e+00> : vector<32x384xf32>
    %11 = tpu.matmul %1, %10, %cst_11 {dimension_numbers = #tpu.dot_dimension_numbers<[1], [0], [0], [1], [0, 0, 1, 1], [], []>} : vector<32x32xf32>, vector<32x384xf32>, vector<32x384xf32> -> vector<32x384xf32>
    %12 = vector.broadcast %3 : vector<32x1xf32> to vector<32x384xf32>
    %13 = arith.addf %11, %12 : vector<32x384xf32>
    %14 = arith.addf %13, %5 : vector<32x384xf32>
    %c0_12 = arith.constant 0 : index
    %c0_13 = arith.constant 0 : index
    %c0_14 = arith.constant 0 : index
    %15 = vector.load %arg7[%c0_12, %c0_13, %c0_14] : memref<2x32x384xf32, #tpu.memory_space<vmem>>, vector<1x32x384xf32>
    %16 = vector.shape_cast %15 : vector<1x32x384xf32> to vector<32x384xf32>
    %17 = vector.shape_cast %14 : vector<32x384xf32> to vector<1x32x384xf32>
    tpu.vector_store %arg7[%c0_12, %c0_13, %c0_14], %17 {strides = array<i32>} : memref<2x32x384xf32, #tpu.memory_space<vmem>>, vector<1x32x384xf32>,
    %c1 = arith.constant 1 : index
    %c0_15 = arith.constant 0 : index
    %c0_16 = arith.constant 0 : index
    %18 = vector.load %arg2[%c1, %c0_15, %c0_16] : memref<2x32x384xf32, #tpu.memory_space<vmem>>, vector<1x32x384xf32>
    %19 = vector.shape_cast %18 : vector<1x32x384xf32> to vector<32x384xf32>
    %cst_17 = arith.constant dense<0.000000e+00> : vector<32x384xf32>
    %20 = tpu.matmul %0, %19, %cst_17 {dimension_numbers = #tpu.dot_dimension_numbers<[1], [0], [0], [1], [0, 0, 1, 1], [], []>} : vector<32x32xf32>, vector<32x384xf32>, vector<32x384xf32> -> vector<32x384xf32>
    %21 = vector.broadcast %2 : vector<32x1xf32> to vector<32x384xf32>
    %22 = arith.addf %20, %21 : vector<32x384xf32>
    %cst_18 = arith.constant 0.000000e+00 : f32
    %23 = vector.broadcast %cst_18 : f32 to vector<32x384xf32>
    %24 = arith.maximumf %22, %23 : vector<32x384xf32>
    %cst_19 = arith.constant dense<0.000000e+00> : vector<32x384xf32>
    %25 = tpu.matmul %1, %24, %cst_19 {dimension_numbers = #tpu.dot_dimension_numbers<[1], [0], [0], [1], [0, 0, 1, 1], [], []>} : vector<32x32xf32>, vector<32x384xf32>, vector<32x384xf32> -> vector<32x384xf32>
    %26 = vector.broadcast %3 : vector<32x1xf32> to vector<32x384xf32>
    %27 = arith.addf %25, %26 : vector<32x384xf32>
    %28 = arith.addf %27, %19 : vector<32x384xf32>
    %c1_20 = arith.constant 1 : index
    %c0_21 = arith.constant 0 : index
    %c0_22 = arith.constant 0 : index
    %29 = vector.load %arg7[%c1_20, %c0_21, %c0_22] : memref<2x32x384xf32, #tpu.memory_space<vmem>>, vector<1x32x384xf32>
    %30 = vector.shape_cast %29 : vector<1x32x384xf32> to vector<32x384xf32>
    %31 = vector.shape_cast %28 : vector<32x384xf32> to vector<1x32x384xf32>
    tpu.vector_store %arg7[%c1_20, %c0_21, %c0_22], %31 {strides = array<i32>} : memref<2x32x384xf32, #tpu.memory_space<vmem>>, vector<1x32x384xf32>,
    return
  }
  func.func @transform_0(%arg0: i32, %arg1: i32) -> (i32, i32, i32) {
    %c0_i32 = arith.constant 0 : i32
    %c0_i32_0 = arith.constant 0 : i32
    return %arg0, %c0_i32, %arg1 : i32, i32, i32
  }
  func.func @transform_1(%arg0: i32, %arg1: i32) -> (i32, i32) {
    %c0_i32 = arith.constant 0 : i32
    %c0_i32_0 = arith.constant 0 : i32
    %c0_i32_1 = arith.constant 0 : i32
    return %c0_i32, %c0_i32_0 : i32, i32
  }
  func.func @transform_2(%arg0: i32, %arg1: i32) -> (i32, i32) {
    %c0_i32 = arith.constant 0 : i32
    %c0_i32_0 = arith.constant 0 : i32
    %c0_i32_1 = arith.constant 0 : i32
    return %c0_i32, %c0_i32_0 : i32, i32
  }
  func.func @transform_3(%arg0: i32, %arg1: i32) -> (i32, i32) {
    %c0_i32 = arith.constant 0 : i32
    %c0_i32_0 = arith.constant 0 : i32
    %c0_i32_1 = arith.constant 0 : i32
    return %c0_i32, %c0_i32_0 : i32, i32
  }
  func.func @transform_4(%arg0: i32, %arg1: i32) -> (i32, i32) {
    %c0_i32 = arith.constant 0 : i32
    %c0_i32_0 = arith.constant 0 : i32
    %c0_i32_1 = arith.constant 0 : i32
    return %c0_i32, %c0_i32_0 : i32, i32
  }
  func.func @transform_5(%arg0: i32, %arg1: i32) -> (i32, i32, i32) {
    %c0_i32 = arith.constant 0 : i32
    %c0_i32_0 = arith.constant 0 : i32
    return %arg0, %c0_i32, %arg1 : i32, i32, i32
  }
}

</mosaic_0001>

<llo_original>
// kernel: tpu_custom_call.1
$region0: #{tpu_custom_call.1}
  #allocation0 [shape = 'u32[]', space=smem, size = 0x4, offset = 0x4, fixed_abs, tag = 'smem constant byte address 0x4 - core index']
  #allocation1 [shape = 'u32[144,128]{1,0:T(1,128)}', space=vmem, size = 0x12000, scoped, tag = 'internal scratch']
  %s0 = inlined_call_operand.hbm [shape: f32[2,32,307], index: 0, kind: input, shape index: {}]
  %s1 = inlined_call_operand.vmem [shape: f32[32,32], index: 1, kind: input, shape index: {}]
  %s2 = inlined_call_operand.vmem [shape: f32[32,1], index: 2, kind: input, shape index: {}]
  %s3 = inlined_call_operand.vmem [shape: f32[32,32], index: 3, kind: input, shape index: {}]
  %s4 = inlined_call_operand.vmem [shape: f32[32,1], index: 4, kind: input, shape index: {}]
  %s5 = inlined_call_operand.hbm [shape: f32[2,32,307], index: 5, kind: output, shape index: {}]
  %s6 = sld [smem:[#allocation0]]
  $region34: #{tpu_custom_call.1} parent=0
    _
  %s8 = ssub.s32 1, %s6
  %s9 = scalar_select 0, %s8, %s6
  $region1: #{tpu_custom_call.1} parent=0
    #allocation2 [shape = 'u8[98304]{0}', space=vmem, size = 0x18000, scoped, tag = 'input window, operand 0, single buffered']
    #allocation3 [shape = 's32[1]{0}', space=sflag, size = 0x4, scoped, tag = 'scoped memory for tpu_custom_call.1']
    #allocation4 [shape = 's32[1]{0}', space=sflag, size = 0x4, scoped, tag = 'scoped memory for tpu_custom_call.1']
    #allocation5 [shape = 'u8[98304]{0}', space=vmem, size = 0x18000, scoped, tag = 'output window, operand 0, single buffered']
    %10 = vsyncpa [#allocation3], 0
    %11 = vsyncpa [#allocation4], 0
    // Predicated region
    $region2: #{tpu_custom_call.1} parent=1 // pred_check
      _
    $region3: #{tpu_custom_call.1} parent=1 // pred_check_branch
      %13 = sbr.rel (0) target = $region5
    $region4: #{tpu_custom_call.1} parent=1 // pred_region
      %s15 = ssub.s32 3072, 3072
      %16 = vsyncadd [#allocation3], %s15
      %s17 = sshll.u32 [#allocation2], 4
      %s18 = int_to_ptr.vmem [resolvable:$true] %s17
      %23 = dma.hbm_to_vmem [thread:$0]  %s0, 3072, %s18, [#allocation3], 384, 384, 24
    $region5: #{tpu_custom_call.1} parent=1 // pred_fallthru
      _
    // Predicated region
    $region6: #{tpu_custom_call.1} parent=1 // pred_check
      _
    $region7: #{tpu_custom_call.1} parent=1 // pred_check_branch
      %25 = sbr.rel (0) target = $region9
    $region8: #{tpu_custom_call.1} parent=1 // pred_region
      _
    $region9: #{tpu_custom_call.1} parent=1 // pred_fallthru
      _
    // Predicated region
    $region10: #{tpu_custom_call.1} parent=1 // pred_check
      _
    $region11: #{tpu_custom_call.1} parent=1 // pred_check_branch
      %27 = sbr.rel (0) target = $region13
    $region12: #{tpu_custom_call.1} parent=1 // pred_region
      _
    $region13: #{tpu_custom_call.1} parent=1 // pred_fallthru
      _
    // Predicated region
    $region14: #{tpu_custom_call.1} parent=1 // pred_check
      _
    $region15: #{tpu_custom_call.1} parent=1 // pred_check_branch
      %29 = sbr.rel (0) target = $region17
    $region16: #{tpu_custom_call.1} parent=1 // pred_region
      _
    $region17: #{tpu_custom_call.1} parent=1 // pred_fallthru
      _
    // Predicated region
    $region18: #{tpu_custom_call.1} parent=1 // pred_check
      _
    $region19: #{tpu_custom_call.1} parent=1 // pred_check_branch
      %31 = sbr.rel (0) target = $region21
    $region20: #{tpu_custom_call.1} parent=1 // pred_region
      _
    $region21: #{tpu_custom_call.1} parent=1 // pred_fallthru
      _
    // Predicated region
    $region22: #{tpu_custom_call.1} parent=1 // pred_check
      _
    $region23: #{tpu_custom_call.1} parent=1 // pred_check_branch
      %33 = sbr.rel (0) target = $region25
    $region24: #{tpu_custom_call.1} parent=1 // pred_region
      %34 = dma.done [#allocation3], 3072
    $region25: #{tpu_custom_call.1} parent=1 // pred_fallthru
      _
    %v35 = vld [vmem:[%s1] sm:$0xff]
    %v36 = vld [vmem:[%s1 + $0x8] sm:$0xff]
    %v37 = vld [vmem:[%s1 + $0x10] sm:$0xff]
    %v38 = vld [vmem:[%s1 + $0x18] sm:$0xff]
    %v39 = vld [vmem:[%s3] sm:$0xff]
    %v40 = vld [vmem:[%s3 + $0x8] sm:$0xff]
    %v41 = vld [vmem:[%s3 + $0x10] sm:$0xff]
    %v42 = vld [vmem:[%s3 + $0x18] sm:$0xff]
    %v43 = vld [vmem:[%s2] sm:$0xff]
    %v44 = vld [vmem:[%s2 + $0x8] sm:$0xff]
    %v45 = vld [vmem:[%s2 + $0x10] sm:$0xff]
    %v46 = vld [vmem:[%s2 + $0x18] sm:$0xff]
    %v47 = vld [vmem:[%s4] sm:$0xff]
    %v48 = vld [vmem:[%s4 + $0x8] sm:$0xff]
    %v49 = vld [vmem:[%s4 + $0x10] sm:$0xff]
    %v50 = vld [vmem:[%s4 + $0x18] sm:$0xff]
    %v51 = vld [vmem:[#allocation2] sm:$0xff]
    %v52 = vld [vmem:[#allocation2 + $0x8] sm:$0xff]
    %v53 = vld [vmem:[#allocation2 + $0x10] sm:$0xff]
    %v54 = vld [vmem:[#allocation2 + $0x18] sm:$0xff]
    %v55 = vld [vmem:[#allocation2 + $0x20] sm:$0xff]
    %v56 = vld [vmem:[#allocation2 + $0x28] sm:$0xff]
    %v57 = vld [vmem:[#allocation2 + $0x30] sm:$0xff]
    %v58 = vld [vmem:[#allocation2 + $0x38] sm:$0xff]
    %v59 = vld [vmem:[#allocation2 + $0x40] sm:$0xff]
    %v60 = vld [vmem:[#allocation2 + $0x48] sm:$0xff]
    %v61 = vld [vmem:[#allocation2 + $0x50] sm:$0xff]
    %v62 = vld [vmem:[#allocation2 + $0x58] sm:$0xff]
    %64 = vset.pattern.permute.xlu0 0
    %65 = vperm.xlu0 %64, %v43
    %v66 = vpop.permute.xlu0 %65
    %69 = vset.pattern.permute.xlu0 0
    %70 = vperm.xlu0 %69, %v44
    %v71 = vpop.permute.xlu0 %70
    %74 = vset.pattern.permute.xlu0 0
    %75 = vperm.xlu0 %74, %v45
    %v76 = vpop.permute.xlu0 %75
    %79 = vset.pattern.permute.xlu0 0
    %80 = vperm.xlu0 %79, %v46
    %v81 = vpop.permute.xlu0 %80
    %vm83 = vcmask 261120
    %v85 = vsel %vm83, %v35, 0
    %v88 = vsel %vm83, %v36, 0
    %v91 = vsel %vm83, %v37, 0
    %v94 = vsel %vm83, %v38, 0
    %96 = vmatprep.subr.mxu0 %v52
    %97 = vmatpush1.msra.mxu0 %v51
    %98 = vmatprep.subr.mxu0 %v55
    %99 = vmatpush1.msra.mxu0 %v54
    %100 = vmatprep.subr.mxu0 %v58
    %101 = vmatpush1.msra.mxu0 %v57
    %102 = vmatprep.subr.mxu0 %v61
    %103 = vmatpush1.msra.mxu0 %v60
    %104 = vmatprep.subr.mxu0 0.0
    %105 = vmatpush1.msra.mxu0 0.0
    %106 = vmatprep.subr.mxu0 0.0
    %107 = vmatpush1.msra.mxu0 0.0
    %108 = vmatprep.subr.mxu0 0.0
    %109 = vmatpush1.msra.mxu0 0.0
    %110 = vmatprep.subr.mxu0 0.0
    %111 = vmatpush1.msra.mxu0 0.0
    %112 = vmatprep.subr.mxu0 0.0
    %113 = vmatpush1.msra.mxu0 0.0
    %114 = vmatprep.subr.mxu0 0.0
    %115 = vmatpush1.msra.mxu0 0.0
    %116 = vmatprep.subr.mxu0 0.0
    %117 = vmatpush1.msra.mxu0 0.0
    %118 = vmatprep.subr.mxu0 0.0
    %119 = vmatpush1.msra.mxu0 0.0
    %120 = vmatprep.subr.mxu0 0.0
    %121 = vmatpush1.msra.mxu0 0.0
    %122 = vmatprep.subr.mxu0 0.0
    %123 = vmatpush1.msra.mxu0 0.0
    %124 = vmatprep.subr.mxu0 0.0
    %125 = vmatpush1.msra.mxu0 0.0
    %126 = vmatprep.subr.mxu0 0.0
    %127 = vmatpush1.msra.mxu0 0.0
    %128 = vmatprep.subr.mxu0 0.0
    %129 = vmatpush1.msra.mxu0 0.0
    %130 = vmatprep.subr.mxu0 0.0
    %131 = vmatpush1.msra.mxu0 0.0
    %132 = vmatprep.subr.mxu0 0.0
    %133 = vmatpush1.msra.mxu0 0.0
    %134 = vmatprep.subr.mxu0 0.0
    %135 = vmatpush1.msra.mxu0 0.0
    %136 = vmatprep.subr.mxu0 0.0
    %137 = vmatpush1.msra.mxu0 0.0
    %138 = vmatprep.subr.mxu0 0.0
    %139 = vmatpush1.msra.mxu0 0.0
    %140 = vmatprep.subr.mxu0 0.0
    %141 = vmatpush1.msra.mxu0 0.0
    %142 = vmatprep.subr.mxu0 0.0
    %143 = vmatpush1.msra.mxu0 0.0
    %144 = vmatprep.subr.mxu0 0.0
    %145 = vmatpush1.msra.mxu0 0.0
    %146 = vmatprep.subr.mxu0 0.0
    %147 = vmatpush1.msra.mxu0 0.0
    %148 = vmatprep.subr.mxu0 0.0
    %149 = vmatpush1.msra.mxu0 0.0
    %150 = vmatprep.subr.mxu0 0.0
    %151 = vmatpush1.msra.mxu0 0.0
    %152 = vmatprep.subr.mxu0 0.0
    %153 = vmatpush1.msra.mxu0 0.0
    %154 = vmatprep.subr.mxu0 0.0
    %155 = vmatpush1.msra.mxu0 0.0
    %156 = vmatprep.subr.mxu0 0.0
    %157 = vmatpush1.msra.mxu0 0.0
    %158 = vmatprep.subr.mxu0 0.0
    %159 = vmatpush1.msra.mxu0 0.0
    %160 = vmatprep.mubr.f32.mxu0 0.0
    %161 = vmatmul.mubr.f32.gmra.mrb[0].mxu0 %v85
    %v162 = vpop.f32.mrb[0].mxu0
    %v163 = vadd.f32 %v66, %v162
    %v164 = vpop.f32.mrb[0].mxu0
    %v165 = vadd.f32 %v66, %v164
    %166 = vmatprep.mubr.f32.mxu0 0.0
    %167 = vmatmul.mubr.f32.gmra.mrb[0].mxu0 %v88
    %v168 = vpop.f32.mrb[0].mxu0
    %v169 = vadd.f32 %v71, %v168
    %v170 = vpop.f32.mrb[0].mxu0
    %v171 = vadd.f32 %v71, %v170
    %172 = vmatprep.mubr.f32.mxu0 0.0
    %173 = vmatmul.mubr.f32.gmra.mrb[0].mxu0 %v91
    %v174 = vpop.f32.mrb[0].mxu0
    %v175 = vadd.f32 %v76, %v174
    %v176 = vpop.f32.mrb[0].mxu0
    %v177 = vadd.f32 %v76, %v176
    %178 = vmatprep.mubr.f32.mxu0 0.0
    %179 = vmatmul.mubr.f32.gmra.mrb[0].mxu0 %v94
    %v180 = vpop.f32.mrb[0].mxu0
    %v181 = vadd.f32 %v81, %v180
    %v182 = vpop.f32.mrb[0].mxu0
    %v183 = vadd.f32 %v81, %v182
    %184 = vdwg.mxu0
    %185 = vmatprep.subr.mxu0 0.0
    %186 = vmatpush1.msra.mxu0 %v53
    %187 = vmatprep.subr.mxu0 0.0
    %188 = vmatpush1.msra.mxu0 %v56
    %189 = vmatprep.subr.mxu0 0.0
    %190 = vmatpush1.msra.mxu0 %v59
    %191 = vmatprep.subr.mxu0 0.0
    %192 = vmatpush1.msra.mxu0 %v62
    %193 = vmatprep.subr.mxu0 0.0
    %194 = vmatpush1.msra.mxu0 0.0
    %195 = vmatprep.subr.mxu0 0.0
    %196 = vmatpush1.msra.mxu0 0.0
    %197 = vmatprep.subr.mxu0 0.0
    %198 = vmatpush1.msra.mxu0 0.0
    %199 = vmatprep.subr.mxu0 0.0
    %200 = vmatpush1.msra.mxu0 0.0
    %201 = vmatprep.subr.mxu0 0.0
    %202 = vmatpush1.msra.mxu0 0.0
    %203 = vmatprep.subr.mxu0 0.0
    %204 = vmatpush1.msra.mxu0 0.0
    %205 = vmatprep.subr.mxu0 0.0
    %206 = vmatpush1.msra.mxu0 0.0
    %207 = vmatprep.subr.mxu0 0.0
    %208 = vmatpush1.msra.mxu0 0.0
    %209 = vmatprep.subr.mxu0 0.0
    %210 = vmatpush1.msra.mxu0 0.0
    %211 = vmatprep.subr.mxu0 0.0
    %212 = vmatpush1.msra.mxu0 0.0
    %213 = vmatprep.subr.mxu0 0.0
    %214 = vmatpush1.msra.mxu0 0.0
    %215 = vmatprep.subr.mxu0 0.0
    %216 = vmatpush1.msra.mxu0 0.0
    %217 = vmatprep.subr.mxu0 0.0
    %218 = vmatpush1.msra.mxu0 0.0
    %219 = vmatprep.subr.mxu0 0.0
    %220 = vmatpush1.msra.mxu0 0.0
    %221 = vmatprep.subr.mxu0 0.0
    %222 = vmatpush1.msra.mxu0 0.0
    %223 = vmatprep.subr.mxu0 0.0
    %224 = vmatpush1.msra.mxu0 0.0
    %225 = vmatprep.subr.mxu0 0.0
    %226 = vmatpush1.msra.mxu0 0.0
    %227 = vmatprep.subr.mxu0 0.0
    %228 = vmatpush1.msra.mxu0 0.0
    %229 = vmatprep.subr.mxu0 0.0
    %230 = vmatpush1.msra.mxu0 0.0
    %231 = vmatprep.subr.mxu0 0.0
    %232 = vmatpush1.msra.mxu0 0.0
    %233 = vmatprep.subr.mxu0 0.0
    %234 = vmatpush1.msra.mxu0 0.0
    %235 = vmatprep.subr.mxu0 0.0
    %236 = vmatpush1.msra.mxu0 0.0
    %237 = vmatprep.subr.mxu0 0.0
    %238 = vmatpush1.msra.mxu0 0.0
    %239 = vmatprep.subr.mxu0 0.0
    %240 = vmatpush1.msra.mxu0 0.0
    %241 = vmatprep.subr.mxu0 0.0
    %242 = vmatpush1.msra.mxu0 0.0
    %243 = vmatprep.subr.mxu0 0.0
    %244 = vmatpush1.msra.mxu0 0.0
    %245 = vmatprep.subr.mxu0 0.0
    %246 = vmatpush1.msra.mxu0 0.0
    %247 = vmatprep.subr.mxu0 0.0
    %248 = vmatpush1.msra.mxu0 0.0
    %249 = vmatprep.mubr.f32.mxu0 0.0
    %250 = vmatmul.mubr.f32.gmra.mrb[0].mxu0 %v85
    %v251 = vpop.f32.mrb[0].mxu0
    %v252 = vadd.f32 %v66, %v251
    %v253 = vpop.f32.mrb[0].mxu0
    %254 = vmatprep.mubr.f32.mxu0 0.0
    %255 = vmatmul.mubr.f32.gmra.mrb[0].mxu0 %v88
    %v256 = vpop.f32.mrb[0].mxu0
    %v257 = vadd.f32 %v71, %v256
    %v258 = vpop.f32.mrb[0].mxu0
    %259 = vmatprep.mubr.f32.mxu0 0.0
    %260 = vmatmul.mubr.f32.gmra.mrb[0].mxu0 %v91
    %v261 = vpop.f32.mrb[0].mxu0
    %v262 = vadd.f32 %v76, %v261
    %v263 = vpop.f32.mrb[0].mxu0
    %264 = vmatprep.mubr.f32.mxu0 0.0
    %265 = vmatmul.mubr.f32.gmra.mrb[0].mxu0 %v94
    %v266 = vpop.f32.mrb[0].mxu0
    %v267 = vadd.f32 %v81, %v266
    %v268 = vpop.f32.mrb[0].mxu0
    %269 = vdwg.mxu0
    %v270 = vmax.f32 %v163, 0.0
    %v271 = vmax.f32 %v165, 0.0
    %v272 = vmax.f32 %v252, 0.0
    %v273 = vmax.f32 %v169, 0.0
    %v274 = vmax.f32 %v171, 0.0
    %v275 = vmax.f32 %v257, 0.0
    %v276 = vmax.f32 %v175, 0.0
    %v277 = vmax.f32 %v177, 0.0
    %v278 = vmax.f32 %v262, 0.0
    %v279 = vmax.f32 %v181, 0.0
    %v280 = vmax.f32 %v183, 0.0
    %v281 = vmax.f32 %v267, 0.0
    %283 = vset.pattern.permute.xlu0 0
    %284 = vperm.xlu0 %283, %v47
    %v285 = vpop.permute.xlu0 %284
    %288 = vset.pattern.permute.xlu0 0
    %289 = vperm.xlu0 %288, %v48
    %v290 = vpop.permute.xlu0 %289
    %293 = vset.pattern.permute.xlu0 0
    %294 = vperm.xlu0 %293, %v49
    %v295 = vpop.permute.xlu0 %294
    %298 = vset.pattern.permute.xlu0 0
    %299 = vperm.xlu0 %298, %v50
    %v300 = vpop.permute.xlu0 %299
    %v303 = vsel %vm83, %v39, 0
    %v306 = vsel %vm83, %v40, 0
    %v309 = vsel %vm83, %v41, 0
    %v312 = vsel %vm83, %v42, 0
    %314 = vmatprep.subr.mxu0 %v271
    %315 = vmatpush1.msra.mxu0 %v270
    %316 = vmatprep.subr.mxu0 %v274
    %317 = vmatpush1.msra.mxu0 %v273
    %318 = vmatprep.subr.mxu0 %v277
    %319 = vmatpush1.msra.mxu0 %v276
    %320 = vmatprep.subr.mxu0 %v280
    %321 = vmatpush1.msra.mxu0 %v279
    %322 = vmatprep.subr.mxu0 0.0
    %323 = vmatpush1.msra.mxu0 0.0
    %324 = vmatprep.subr.mxu0 0.0
    %325 = vmatpush1.msra.mxu0 0.0
    %326 = vmatprep.subr.mxu0 0.0
    %327 = vmatpush1.msra.mxu0 0.0
    %328 = vmatprep.subr.mxu0 0.0
    %329 = vmatpush1.msra.mxu0 0.0
    %330 = vmatprep.subr.mxu0 0.0
    %331 = vmatpush1.msra.mxu0 0.0
    %332 = vmatprep.subr.mxu0 0.0
    %333 = vmatpush1.msra.mxu0 0.0
    %334 = vmatprep.subr.mxu0 0.0
    %335 = vmatpush1.msra.mxu0 0.0
    %336 = vmatprep.subr.mxu0 0.0
    %337 = vmatpush1.msra.mxu0 0.0
    %338 = vmatprep.subr.mxu0 0.0
    %339 = vmatpush1.msra.mxu0 0.0
    %340 = vmatprep.subr.mxu0 0.0
    %341 = vmatpush1.msra.mxu0 0.0
    %342 = vmatprep.subr.mxu0 0.0
    %343 = vmatpush1.msra.mxu0 0.0
    %344 = vmatprep.subr.mxu0 0.0
    %345 = vmatpush1.msra.mxu0 0.0
    %346 = vmatprep.subr.mxu0 0.0
    %347 = vmatpush1.msra.mxu0 0.0
    %348 = vmatprep.subr.mxu0 0.0
    %349 = vmatpush1.msra.mxu0 0.0
    %350 = vmatprep.subr.mxu0 0.0
    %351 = vmatpush1.msra.mxu0 0.0
    %352 = vmatprep.subr.mxu0 0.0
    %353 = vmatpush1.msra.mxu0 0.0
    %354 = vmatprep.subr.mxu0 0.0
    %355 = vmatpush1.msra.mxu0 0.0
    %356 = vmatprep.subr.mxu0 0.0
    %357 = vmatpush1.msra.mxu0 0.0
    %358 = vmatprep.subr.mxu0 0.0
    %359 = vmatpush1.msra.mxu0 0.0
    %360 = vmatprep.subr.mxu0 0.0
    %361 = vmatpush1.msra.mxu0 0.0
    %362 = vmatprep.subr.mxu0 0.0
    %363 = vmatpush1.msra.mxu0 0.0
    %364 = vmatprep.subr.mxu0 0.0
    %365 = vmatpush1.msra.mxu0 0.0
    %366 = vmatprep.subr.mxu0 0.0
    %367 = vmatpush1.msra.mxu0 0.0
    %368 = vmatprep.subr.mxu0 0.0
    %369 = vmatpush1.msra.mxu0 0.0
    %370 = vmatprep.subr.mxu0 0.0
    %371 = vmatpush1.msra.mxu0 0.0
    %372 = vmatprep.subr.mxu0 0.0
    %373 = vmatpush1.msra.mxu0 0.0
    %374 = vmatprep.subr.mxu0 0.0
    %375 = vmatpush1.msra.mxu0 0.0
    %376 = vmatprep.subr.mxu0 0.0
    %377 = vmatpush1.msra.mxu0 0.0
    %378 = vmatprep.mubr.f32.mxu0 0.0
    %379 = vmatmul.mubr.f32.gmra.mrb[0].mxu0 %v303
    %v380 = vpop.f32.mrb[0].mxu0
    %v381 = vadd.f32 %v285, %v380
    %v382 = vpop.f32.mrb[0].mxu0
    %v383 = vadd.f32 %v285, %v382
    %384 = vmatprep.mubr.f32.mxu0 0.0
    %385 = vmatmul.mubr.f32.gmra.mrb[0].mxu0 %v306
    %v386 = vpop.f32.mrb[0].mxu0
    %v387 = vadd.f32 %v290, %v386
    %v388 = vpop.f32.mrb[0].mxu0
    %v389 = vadd.f32 %v290, %v388
    %390 = vmatprep.mubr.f32.mxu0 0.0
    %391 = vmatmul.mubr.f32.gmra.mrb[0].mxu0 %v309
    %v392 = vpop.f32.mrb[0].mxu0
    %v393 = vadd.f32 %v295, %v392
    %v394 = vpop.f32.mrb[0].mxu0
    %v395 = vadd.f32 %v295, %v394
    %396 = vmatprep.mubr.f32.mxu0 0.0
    %397 = vmatmul.mubr.f32.gmra.mrb[0].mxu0 %v312
    %v398 = vpop.f32.mrb[0].mxu0
    %v399 = vadd.f32 %v300, %v398
    %v400 = vpop.f32.mrb[0].mxu0
    %v401 = vadd.f32 %v300, %v400
    %402 = vdwg.mxu0
    %403 = vmatprep.subr.mxu0 0.0
    %404 = vmatpush1.msra.mxu0 %v272
    %405 = vmatprep.subr.mxu0 0.0
    %406 = vmatpush1.msra.mxu0 %v275
    %407 = vmatprep.subr.mxu0 0.0
    %408 = vmatpush1.msra.mxu0 %v278
    %409 = vmatprep.subr.mxu0 0.0
    %410 = vmatpush1.msra.mxu0 %v281
    %411 = vmatprep.subr.mxu0 0.0
    %412 = vmatpush1.msra.mxu0 0.0
    %413 = vmatprep.subr.mxu0 0.0
    %414 = vmatpush1.msra.mxu0 0.0
    %415 = vmatprep.subr.mxu0 0.0
    %416 = vmatpush1.msra.mxu0 0.0
    %417 = vmatprep.subr.mxu0 0.0
    %418 = vmatpush1.msra.mxu0 0.0
    %419 = vmatprep.subr.mxu0 0.0
    %420 = vmatpush1.msra.mxu0 0.0
    %421 = vmatprep.subr.mxu0 0.0
    %422 = vmatpush1.msra.mxu0 0.0
    %423 = vmatprep.subr.mxu0 0.0
    %424 = vmatpush1.msra.mxu0 0.0
    %425 = vmatprep.subr.mxu0 0.0
    %426 = vmatpush1.msra.mxu0 0.0
    %427 = vmatprep.subr.mxu0 0.0
    %428 = vmatpush1.msra.mxu0 0.0
    %429 = vmatprep.subr.mxu0 0.0
    %430 = vmatpush1.msra.mxu0 0.0
    %431 = vmatprep.subr.mxu0 0.0
    %432 = vmatpush1.msra.mxu0 0.0
    %433 = vmatprep.subr.mxu0 0.0
    %434 = vmatpush1.msra.mxu0 0.0
    %435 = vmatprep.subr.mxu0 0.0
    %436 = vmatpush1.msra.mxu0 0.0
    %437 = vmatprep.subr.mxu0 0.0
    %438 = vmatpush1.msra.mxu0 0.0
    %439 = vmatprep.subr.mxu0 0.0
    %440 = vmatpush1.msra.mxu0 0.0
    %441 = vmatprep.subr.mxu0 0.0
    %442 = vmatpush1.msra.mxu0 0.0
    %443 = vmatprep.subr.mxu0 0.0
    %444 = vmatpush1.msra.mxu0 0.0
    %445 = vmatprep.subr.mxu0 0.0
    %446 = vmatpush1.msra.mxu0 0.0
    %447 = vmatprep.subr.mxu0 0.0
    %448 = vmatpush1.msra.mxu0 0.0
    %449 = vmatprep.subr.mxu0 0.0
    %450 = vmatpush1.msra.mxu0 0.0
    %451 = vmatprep.subr.mxu0 0.0
    %452 = vmatpush1.msra.mxu0 0.0
    %453 = vmatprep.subr.mxu0 0.0
    %454 = vmatpush1.msra.mxu0 0.0
    %455 = vmatprep.subr.mxu0 0.0
    %456 = vmatpush1.msra.mxu0 0.0
    %457 = vmatprep.subr.mxu0 0.0
    %458 = vmatpush1.msra.mxu0 0.0
    %459 = vmatprep.subr.mxu0 0.0
    %460 = vmatpush1.msra.mxu0 0.0
    %461 = vmatprep.subr.mxu0 0.0
    %462 = vmatpush1.msra.mxu0 0.0
    %463 = vmatprep.subr.mxu0 0.0
    %464 = vmatpush1.msra.mxu0 0.0
    %465 = vmatprep.subr.mxu0 0.0
    %466 = vmatpush1.msra.mxu0 0.0
    %467 = vmatprep.mubr.f32.mxu0 0.0
    %468 = vmatmul.mubr.f32.gmra.mrb[0].mxu0 %v303
    %v469 = vpop.f32.mrb[0].mxu0
    %v470 = vadd.f32 %v285, %v469
    %v471 = vpop.f32.mrb[0].mxu0
    %472 = vmatprep.mubr.f32.mxu0 0.0
    %473 = vmatmul.mubr.f32.gmra.mrb[0].mxu0 %v306
    %v474 = vpop.f32.mrb[0].mxu0
    %v475 = vadd.f32 %v290, %v474
    %v476 = vpop.f32.mrb[0].mxu0
    %477 = vmatprep.mubr.f32.mxu0 0.0
    %478 = vmatmul.mubr.f32.gmra.mrb[0].mxu0 %v309
    %v479 = vpop.f32.mrb[0].mxu0
    %v480 = vadd.f32 %v295, %v479
    %v481 = vpop.f32.mrb[0].mxu0
    %482 = vmatprep.mubr.f32.mxu0 0.0
    %483 = vmatmul.mubr.f32.gmra.mrb[0].mxu0 %v312
    %v484 = vpop.f32.mrb[0].mxu0
    %v485 = vadd.f32 %v300, %v484
    %v486 = vpop.f32.mrb[0].mxu0
    %487 = vdwg.mxu0
    %v488 = vadd.f32 %v381, %v51
    %v489 = vadd.f32 %v383, %v52
    %v490 = vadd.f32 %v470, %v53
    %v491 = vadd.f32 %v387, %v54
    %v492 = vadd.f32 %v389, %v55
    %v493 = vadd.f32 %v475, %v56
    %v494 = vadd.f32 %v393, %v57
    %v495 = vadd.f32 %v395, %v58
    %v496 = vadd.f32 %v480, %v59
    %v497 = vadd.f32 %v399, %v60
    %v498 = vadd.f32 %v401, %v61
    %v499 = vadd.f32 %v485, %v62
    %500 = vst [vmem:[#allocation5] sm:$0xff] %v488
    %501 = vst [vmem:[#allocation5 + $0x8] sm:$0xff] %v489
    %502 = vst [vmem:[#allocation5 + $0x10] sm:$0xff] %v490
    %503 = vst [vmem:[#allocation5 + $0x18] sm:$0xff] %v491
    %504 = vst [vmem:[#allocation5 + $0x20] sm:$0xff] %v492
    %505 = vst [vmem:[#allocation5 + $0x28] sm:$0xff] %v493
    %506 = vst [vmem:[#allocation5 + $0x30] sm:$0xff] %v494
    %507 = vst [vmem:[#allocation5 + $0x38] sm:$0xff] %v495
    %508 = vst [vmem:[#allocation5 + $0x40] sm:$0xff] %v496
    %509 = vst [vmem:[#allocation5 + $0x48] sm:$0xff] %v497
    %510 = vst [vmem:[#allocation5 + $0x50] sm:$0xff] %v498
    %511 = vst [vmem:[#allocation5 + $0x58] sm:$0xff] %v499
    %s512 = scalar_lea.vmem [#allocation2], 96
    %v513 = vld [vmem:[%s512] sm:$0xff]
    %v514 = vld [vmem:[%s512 + $0x8] sm:$0xff]
    %v515 = vld [vmem:[%s512 + $0x10] sm:$0xff]
    %v516 = vld [vmem:[%s512 + $0x18] sm:$0xff]
    %v517 = vld [vmem:[%s512 + $0x20] sm:$0xff]
    %v518 = vld [vmem:[%s512 + $0x28] sm:$0xff]
    %v519 = vld [vmem:[%s512 + $0x30] sm:$0xff]
    %v520 = vld [vmem:[%s512 + $0x38] sm:$0xff]
    %v521 = vld [vmem:[%s512 + $0x40] sm:$0xff]
    %v522 = vld [vmem:[%s512 + $0x48] sm:$0xff]
    %v523 = vld [vmem:[%s512 + $0x50] sm:$0xff]
    %v524 = vld [vmem:[%s512 + $0x58] sm:$0xff]
    %525 = vmatprep.subr.mxu0 %v514
    %526 = vmatpush1.msra.mxu0 %v513
    %527 = vmatprep.subr.mxu0 %v517
    %528 = vmatpush1.msra.mxu0 %v516
    %529 = vmatprep.subr.mxu0 %v520
    %530 = vmatpush1.msra.mxu0 %v519
    %531 = vmatprep.subr.mxu0 %v523
    %532 = vmatpush1.msra.mxu0 %v522
    %533 = vmatprep.subr.mxu0 0.0
    %534 = vmatpush1.msra.mxu0 0.0
    %535 = vmatprep.subr.mxu0 0.0
    %536 = vmatpush1.msra.mxu0 0.0
    %537 = vmatprep.subr.mxu0 0.0
    %538 = vmatpush1.msra.mxu0 0.0
    %539 = vmatprep.subr.mxu0 0.0
    %540 = vmatpush1.msra.mxu0 0.0
    %541 = vmatprep.subr.mxu0 0.0
    %542 = vmatpush1.msra.mxu0 0.0
    %543 = vmatprep.subr.mxu0 0.0
    %544 = vmatpush1.msra.mxu0 0.0
    %545 = vmatprep.subr.mxu0 0.0
    %546 = vmatpush1.msra.mxu0 0.0
    %547 = vmatprep.subr.mxu0 0.0
    %548 = vmatpush1.msra.mxu0 0.0
    %549 = vmatprep.subr.mxu0 0.0
    %550 = vmatpush1.msra.mxu0 0.0
    %551 = vmatprep.subr.mxu0 0.0
    %552 = vmatpush1.msra.mxu0 0.0
    %553 = vmatprep.subr.mxu0 0.0
    %554 = vmatpush1.msra.mxu0 0.0
    %555 = vmatprep.subr.mxu0 0.0
    %556 = vmatpush1.msra.mxu0 0.0
    %557 = vmatprep.subr.mxu0 0.0
    %558 = vmatpush1.msra.mxu0 0.0
    %559 = vmatprep.subr.mxu0 0.0
    %560 = vmatpush1.msra.mxu0 0.0
    %561 = vmatprep.subr.mxu0 0.0
    %562 = vmatpush1.msra.mxu0 0.0
    %563 = vmatprep.subr.mxu0 0.0
    %564 = vmatpush1.msra.mxu0 0.0
    %565 = vmatprep.subr.mxu0 0.0
    %566 = vmatpush1.msra.mxu0 0.0
    %567 = vmatprep.subr.mxu0 0.0
    %568 = vmatpush1.msra.mxu0 0.0
    %569 = vmatprep.subr.mxu0 0.0
    %570 = vmatpush1.msra.mxu0 0.0
    %571 = vmatprep.subr.mxu0 0.0
    %572 = vmatpush1.msra.mxu0 0.0
    %573 = vmatprep.subr.mxu0 0.0
    %574 = vmatpush1.msra.mxu0 0.0
    %575 = vmatprep.subr.mxu0 0.0
    %576 = vmatpush1.msra.mxu0 0.0
    %577 = vmatprep.subr.mxu0 0.0
    %578 = vmatpush1.msra.mxu0 0.0
    %579 = vmatprep.subr.mxu0 0.0
    %580 = vmatpush1.msra.mxu0 0.0
    %581 = vmatprep.subr.mxu0 0.0
    %582 = vmatpush1.msra.mxu0 0.0
    %583 = vmatprep.subr.mxu0 0.0
    %584 = vmatpush1.msra.mxu0 0.0
    %585 = vmatprep.subr.mxu0 0.0
    %586 = vmatpush1.msra.mxu0 0.0
    %587 = vmatprep.subr.mxu0 0.0
    %588 = vmatpush1.msra.mxu0 0.0
    %589 = vmatprep.mubr.f32.mxu0 0.0
    %590 = vmatmul.mubr.f32.gmra.mrb[0].mxu0 %v85
    %v591 = vpop.f32.mrb[0].mxu0
    %v592 = vadd.f32 %v66, %v591
    %v593 = vpop.f32.mrb[0].mxu0
    %v594 = vadd.f32 %v66, %v593
    %595 = vmatprep.mubr.f32.mxu0 0.0
    %596 = vmatmul.mubr.f32.gmra.mrb[0].mxu0 %v88
    %v597 = vpop.f32.mrb[0].mxu0
    %v598 = vadd.f32 %v71, %v597
    %v599 = vpop.f32.mrb[0].mxu0
    %v600 = vadd.f32 %v71, %v599
    %601 = vmatprep.mubr.f32.mxu0 0.0
    %602 = vmatmul.mubr.f32.gmra.mrb[0].mxu0 %v91
    %v603 = vpop.f32.mrb[0].mxu0
    %v604 = vadd.f32 %v76, %v603
    %v605 = vpop.f32.mrb[0].mxu0
    %v606 = vadd.f32 %v76, %v605
    %607 = vmatprep.mubr.f32.mxu0 0.0
    %608 = vmatmul.mubr.f32.gmra.mrb[0].mxu0 %v94
    %v609 = vpop.f32.mrb[0].mxu0
    %v610 = vadd.f32 %v81, %v609
    %v611 = vpop.f32.mrb[0].mxu0
    %v612 = vadd.f32 %v81, %v611
    %613 = vdwg.mxu0
    %614 = vmatprep.subr.mxu0 0.0
    %615 = vmatpush1.msra.mxu0 %v515
    %616 = vmatprep.subr.mxu0 0.0
    %617 = vmatpush1.msra.mxu0 %v518
    %618 = vmatprep.subr.mxu0 0.0
    %619 = vmatpush1.msra.mxu0 %v521
    %620 = vmatprep.subr.mxu0 0.0
    %621 = vmatpush1.msra.mxu0 %v524
    %622 = vmatprep.subr.mxu0 0.0
    %623 = vmatpush1.msra.mxu0 0.0
    %624 = vmatprep.subr.mxu0 0.0
    %625 = vmatpush1.msra.mxu0 0.0
    %626 = vmatprep.subr.mxu0 0.0
    %627 = vmatpush1.msra.mxu0 0.0
    %628 = vmatprep.subr.mxu0 0.0
    %629 = vmatpush1.msra.mxu0 0.0
    %630 = vmatprep.subr.mxu0 0.0
    %631 = vmatpush1.msra.mxu0 0.0
    %632 = vmatprep.subr.mxu0 0.0
    %633 = vmatpush1.msra.mxu0 0.0
    %634 = vmatprep.subr.mxu0 0.0
    %635 = vmatpush1.msra.mxu0 0.0
    %636 = vmatprep.subr.mxu0 0.0
    %637 = vmatpush1.msra.mxu0 0.0
    %638 = vmatprep.subr.mxu0 0.0
    %639 = vmatpush1.msra.mxu0 0.0
    %640 = vmatprep.subr.mxu0 0.0
    %641 = vmatpush1.msra.mxu0 0.0
    %642 = vmatprep.subr.mxu0 0.0
    %643 = vmatpush1.msra.mxu0 0.0
    %644 = vmatprep.subr.mxu0 0.0
    %645 = vmatpush1.msra.mxu0 0.0
    %646 = vmatprep.subr.mxu0 0.0
    %647 = vmatpush1.msra.mxu0 0.0
    %648 = vmatprep.subr.mxu0 0.0
    %649 = vmatpush1.msra.mxu0 0.0
    %650 = vmatprep.subr.mxu0 0.0
    %651 = vmatpush1.msra.mxu0 0.0
    %652 = vmatprep.subr.mxu0 0.0
    %653 = vmatpush1.msra.mxu0 0.0
    %654 = vmatprep.subr.mxu0 0.0
    %655 = vmatpush1.msra.mxu0 0.0
    %656 = vmatprep.subr.mxu0 0.0
    %657 = vmatpush1.msra.mxu0 0.0
    %658 = vmatprep.subr.mxu0 0.0
    %659 = vmatpush1.msra.mxu0 0.0
    %660 = vmatprep.subr.mxu0 0.0
    %661 = vmatpush1.msra.mxu0 0.0
    %662 = vmatprep.subr.mxu0 0.0
    %663 = vmatpush1.msra.mxu0 0.0
    %664 = vmatprep.subr.mxu0 0.0
    %665 = vmatpush1.msra.mxu0 0.0
    %666 = vmatprep.subr.mxu0 0.0
    %667 = vmatpush1.msra.mxu0 0.0
    %668 = vmatprep.subr.mxu0 0.0
    %669 = vmatpush1.msra.mxu0 0.0
    %670 = vmatprep.subr.mxu0 0.0
    %671 = vmatpush1.msra.mxu0 0.0
    %672 = vmatprep.subr.mxu0 0.0
    %673 = vmatpush1.msra.mxu0 0.0
    %674 = vmatprep.subr.mxu0 0.0
    %675 = vmatpush1.msra.mxu0 0.0
    %676 = vmatprep.subr.mxu0 0.0
    %677 = vmatpush1.msra.mxu0 0.0
    %678 = vmatprep.mubr.f32.mxu0 0.0
    %679 = vmatmul.mubr.f32.gmra.mrb[0].mxu0 %v85
    %v680 = vpop.f32.mrb[0].mxu0
    %v681 = vadd.f32 %v66, %v680
    %v682 = vpop.f32.mrb[0].mxu0
    %683 = vmatprep.mubr.f32.mxu0 0.0
    %684 = vmatmul.mubr.f32.gmra.mrb[0].mxu0 %v88
    %v685 = vpop.f32.mrb[0].mxu0
    %v686 = vadd.f32 %v71, %v685
    %v687 = vpop.f32.mrb[0].mxu0
    %688 = vmatprep.mubr.f32.mxu0 0.0
    %689 = vmatmul.mubr.f32.gmra.mrb[0].mxu0 %v91
    %v690 = vpop.f32.mrb[0].mxu0
    %v691 = vadd.f32 %v76, %v690
    %v692 = vpop.f32.mrb[0].mxu0
    %693 = vmatprep.mubr.f32.mxu0 0.0
    %694 = vmatmul.mubr.f32.gmra.mrb[0].mxu0 %v94
    %v695 = vpop.f32.mrb[0].mxu0
    %v696 = vadd.f32 %v81, %v695
    %v697 = vpop.f32.mrb[0].mxu0
    %698 = vdwg.mxu0
    %v699 = vmax.f32 %v592, 0.0
    %v700 = vmax.f32 %v594, 0.0
    %v701 = vmax.f32 %v681, 0.0
    %v702 = vmax.f32 %v598, 0.0
    %v703 = vmax.f32 %v600, 0.0
    %v704 = vmax.f32 %v686, 0.0
    %v705 = vmax.f32 %v604, 0.0
    %v706 = vmax.f32 %v606, 0.0
    %v707 = vmax.f32 %v691, 0.0
    %v708 = vmax.f32 %v610, 0.0
    %v709 = vmax.f32 %v612, 0.0
    %v710 = vmax.f32 %v696, 0.0
    %711 = vmatprep.subr.mxu0 %v700
    %712 = vmatpush1.msra.mxu0 %v699
    %713 = vmatprep.subr.mxu0 %v703
    %714 = vmatpush1.msra.mxu0 %v702
    %715 = vmatprep.subr.mxu0 %v706
    %716 = vmatpush1.msra.mxu0 %v705
    %717 = vmatprep.subr.mxu0 %v709
    %718 = vmatpush1.msra.mxu0 %v708
    %719 = vmatprep.subr.mxu0 0.0
    %720 = vmatpush1.msra.mxu0 0.0
    %721 = vmatprep.subr.mxu0 0.0
    %722 = vmatpush1.msra.mxu0 0.0
    %723 = vmatprep.subr.mxu0 0.0
    %724 = vmatpush1.msra.mxu0 0.0
    %725 = vmatprep.subr.mxu0 0.0
    %726 = vmatpush1.msra.mxu0 0.0
    %727 = vmatprep.subr.mxu0 0.0
    %728 = vmatpush1.msra.mxu0 0.0
    %729 = vmatprep.subr.mxu0 0.0
    %730 = vmatpush1.msra.mxu0 0.0
    %731 = vmatprep.subr.mxu0 0.0
    %732 = vmatpush1.msra.mxu0 0.0
    %733 = vmatprep.subr.mxu0 0.0
    %734 = vmatpush1.msra.mxu0 0.0
    %735 = vmatprep.subr.mxu0 0.0
    %736 = vmatpush1.msra.mxu0 0.0
    %737 = vmatprep.subr.mxu0 0.0
    %738 = vmatpush1.msra.mxu0 0.0
    %739 = vmatprep.subr.mxu0 0.0
    %740 = vmatpush1.msra.mxu0 0.0
    %741 = vmatprep.subr.mxu0 0.0
    %742 = vmatpush1.msra.mxu0 0.0
    %743 = vmatprep.subr.mxu0 0.0
    %744 = vmatpush1.msra.mxu0 0.0
    %745 = vmatprep.subr.mxu0 0.0
    %746 = vmatpush1.msra.mxu0 0.0
    %747 = vmatprep.subr.mxu0 0.0
    %748 = vmatpush1.msra.mxu0 0.0
    %749 = vmatprep.subr.mxu0 0.0
    %750 = vmatpush1.msra.mxu0 0.0
    %751 = vmatprep.subr.mxu0 0.0
    %752 = vmatpush1.msra.mxu0 0.0
    %753 = vmatprep.subr.mxu0 0.0
    %754 = vmatpush1.msra.mxu0 0.0
    %755 = vmatprep.subr.mxu0 0.0
    %756 = vmatpush1.msra.mxu0 0.0
    %757 = vmatprep.subr.mxu0 0.0
    %758 = vmatpush1.msra.mxu0 0.0
    %759 = vmatprep.subr.mxu0 0.0
    %760 = vmatpush1.msra.mxu0 0.0
    %761 = vmatprep.subr.mxu0 0.0
    %762 = vmatpush1.msra.mxu0 0.0
    %763 = vmatprep.subr.mxu0 0.0
    %764 = vmatpush1.msra.mxu0 0.0
    %765 = vmatprep.subr.mxu0 0.0
    %766 = vmatpush1.msra.mxu0 0.0
    %767 = vmatprep.subr.mxu0 0.0
    %768 = vmatpush1.msra.mxu0 0.0
    %769 = vmatprep.subr.mxu0 0.0
    %770 = vmatpush1.msra.mxu0 0.0
    %771 = vmatprep.subr.mxu0 0.0
    %772 = vmatpush1.msra.mxu0 0.0
    %773 = vmatprep.subr.mxu0 0.0
    %774 = vmatpush1.msra.mxu0 0.0
    %775 = vmatprep.mubr.f32.mxu0 0.0
    %776 = vmatmul.mubr.f32.gmra.mrb[0].mxu0 %v303
    %v777 = vpop.f32.mrb[0].mxu0
    %v778 = vadd.f32 %v285, %v777
    %v779 = vpop.f32.mrb[0].mxu0
    %v780 = vadd.f32 %v285, %v779
    %781 = vmatprep.mubr.f32.mxu0 0.0
    %782 = vmatmul.mubr.f32.gmra.mrb[0].mxu0 %v306
    %v783 = vpop.f32.mrb[0].mxu0
    %v784 = vadd.f32 %v290, %v783
    %v785 = vpop.f32.mrb[0].mxu0
    %v786 = vadd.f32 %v290, %v785
    %787 = vmatprep.mubr.f32.mxu0 0.0
    %788 = vmatmul.mubr.f32.gmra.mrb[0].mxu0 %v309
    %v789 = vpop.f32.mrb[0].mxu0
    %v790 = vadd.f32 %v295, %v789
    %v791 = vpop.f32.mrb[0].mxu0
    %v792 = vadd.f32 %v295, %v791
    %793 = vmatprep.mubr.f32.mxu0 0.0
    %794 = vmatmul.mubr.f32.gmra.mrb[0].mxu0 %v312
    %v795 = vpop.f32.mrb[0].mxu0
    %v796 = vadd.f32 %v300, %v795
    %v797 = vpop.f32.mrb[0].mxu0
    %v798 = vadd.f32 %v300, %v797
    %799 = vdwg.mxu0
    %800 = vmatprep.subr.mxu0 0.0
    %801 = vmatpush1.msra.mxu0 %v701
    %802 = vmatprep.subr.mxu0 0.0
    %803 = vmatpush1.msra.mxu0 %v704
    %804 = vmatprep.subr.mxu0 0.0
    %805 = vmatpush1.msra.mxu0 %v707
    %806 = vmatprep.subr.mxu0 0.0
    %807 = vmatpush1.msra.mxu0 %v710
    %808 = vmatprep.subr.mxu0 0.0
    %809 = vmatpush1.msra.mxu0 0.0
    %810 = vmatprep.subr.mxu0 0.0
    %811 = vmatpush1.msra.mxu0 0.0
    %812 = vmatprep.subr.mxu0 0.0
    %813 = vmatpush1.msra.mxu0 0.0
    %814 = vmatprep.subr.mxu0 0.0
    %815 = vmatpush1.msra.mxu0 0.0
    %816 = vmatprep.subr.mxu0 0.0
    %817 = vmatpush1.msra.mxu0 0.0
    %818 = vmatprep.subr.mxu0 0.0
    %819 = vmatpush1.msra.mxu0 0.0
    %820 = vmatprep.subr.mxu0 0.0
    %821 = vmatpush1.msra.mxu0 0.0
    %822 = vmatprep.subr.mxu0 0.0
    %823 = vmatpush1.msra.mxu0 0.0
    %824 = vmatprep.subr.mxu0 0.0
    %825 = vmatpush1.msra.mxu0 0.0
    %826 = vmatprep.subr.mxu0 0.0
    %827 = vmatpush1.msra.mxu0 0.0
    %828 = vmatprep.subr.mxu0 0.0
    %829 = vmatpush1.msra.mxu0 0.0
    %830 = vmatprep.subr.mxu0 0.0
    %831 = vmatpush1.msra.mxu0 0.0
    %832 = vmatprep.subr.mxu0 0.0
    %833 = vmatpush1.msra.mxu0 0.0
    %834 = vmatprep.subr.mxu0 0.0
    %835 = vmatpush1.msra.mxu0 0.0
    %836 = vmatprep.subr.mxu0 0.0
    %837 = vmatpush1.msra.mxu0 0.0
    %838 = vmatprep.subr.mxu0 0.0
    %839 = vmatpush1.msra.mxu0 0.0
    %840 = vmatprep.subr.mxu0 0.0
    %841 = vmatpush1.msra.mxu0 0.0
    %842 = vmatprep.subr.mxu0 0.0
    %843 = vmatpush1.msra.mxu0 0.0
    %844 = vmatprep.subr.mxu0 0.0
    %845 = vmatpush1.msra.mxu0 0.0
    %846 = vmatprep.subr.mxu0 0.0
    %847 = vmatpush1.msra.mxu0 0.0
    %848 = vmatprep.subr.mxu0 0.0
    %849 = vmatpush1.msra.mxu0 0.0
    %850 = vmatprep.subr.mxu0 0.0
    %851 = vmatpush1.msra.mxu0 0.0
    %852 = vmatprep.subr.mxu0 0.0
    %853 = vmatpush1.msra.mxu0 0.0
    %854 = vmatprep.subr.mxu0 0.0
    %855 = vmatpush1.msra.mxu0 0.0
    %856 = vmatprep.subr.mxu0 0.0
    %857 = vmatpush1.msra.mxu0 0.0
    %858 = vmatprep.subr.mxu0 0.0
    %859 = vmatpush1.msra.mxu0 0.0
    %860 = vmatprep.subr.mxu0 0.0
    %861 = vmatpush1.msra.mxu0 0.0
    %862 = vmatprep.subr.mxu0 0.0
    %863 = vmatpush1.msra.mxu0 0.0
    %864 = vmatprep.mubr.f32.mxu0 0.0
    %865 = vmatmul.mubr.f32.gmra.mrb[0].mxu0 %v303
    %v866 = vpop.f32.mrb[0].mxu0
    %v867 = vadd.f32 %v285, %v866
    %v868 = vpop.f32.mrb[0].mxu0
    %869 = vmatprep.mubr.f32.mxu0 0.0
    %870 = vmatmul.mubr.f32.gmra.mrb[0].mxu0 %v306
    %v871 = vpop.f32.mrb[0].mxu0
    %v872 = vadd.f32 %v290, %v871
    %v873 = vpop.f32.mrb[0].mxu0
    %874 = vmatprep.mubr.f32.mxu0 0.0
    %875 = vmatmul.mubr.f32.gmra.mrb[0].mxu0 %v309
    %v876 = vpop.f32.mrb[0].mxu0
    %v877 = vadd.f32 %v295, %v876
    %v878 = vpop.f32.mrb[0].mxu0
    %879 = vmatprep.mubr.f32.mxu0 0.0
    %880 = vmatmul.mubr.f32.gmra.mrb[0].mxu0 %v312
    %v881 = vpop.f32.mrb[0].mxu0
    %v882 = vadd.f32 %v300, %v881
    %v883 = vpop.f32.mrb[0].mxu0
    %884 = vdwg.mxu0
    %v885 = vadd.f32 %v778, %v513
    %v886 = vadd.f32 %v780, %v514
    %v887 = vadd.f32 %v867, %v515
    %v888 = vadd.f32 %v784, %v516
    %v889 = vadd.f32 %v786, %v517
    %v890 = vadd.f32 %v872, %v518
    %v891 = vadd.f32 %v790, %v519
    %v892 = vadd.f32 %v792, %v520
    %v893 = vadd.f32 %v877, %v521
    %v894 = vadd.f32 %v796, %v522
    %v895 = vadd.f32 %v798, %v523
    %v896 = vadd.f32 %v882, %v524
    %s897 = scalar_lea.vmem [#allocation5], 96
    %898 = vst [vmem:[%s897] sm:$0xff] %v885
    %899 = vst [vmem:[%s897 + $0x8] sm:$0xff] %v886
    %900 = vst [vmem:[%s897 + $0x10] sm:$0xff] %v887
    %901 = vst [vmem:[%s897 + $0x18] sm:$0xff] %v888
    %902 = vst [vmem:[%s897 + $0x20] sm:$0xff] %v889
    %903 = vst [vmem:[%s897 + $0x28] sm:$0xff] %v890
    %904 = vst [vmem:[%s897 + $0x30] sm:$0xff] %v891
    %905 = vst [vmem:[%s897 + $0x38] sm:$0xff] %v892
    %906 = vst [vmem:[%s897 + $0x40] sm:$0xff] %v893
    %907 = vst [vmem:[%s897 + $0x48] sm:$0xff] %v894
    %908 = vst [vmem:[%s897 + $0x50] sm:$0xff] %v895
    %909 = vst [vmem:[%s897 + $0x58] sm:$0xff] %v896
    // Predicated region
    $region26: #{tpu_custom_call.1} parent=1 // pred_check
      _
    $region27: #{tpu_custom_call.1} parent=1 // pred_check_branch
      %911 = sbr.rel (0) target = $region29
    $region28: #{tpu_custom_call.1} parent=1 // pred_region
      %s913 = ssub.s32 3072, 3072
      %914 = vsyncadd [#allocation4], %s913
      %s915 = sshll.u32 [#allocation5], 4
      %s916 = int_to_ptr.vmem [resolvable:$true] %s915
      %921 = dma.vmem_to_hbm [thread:$0]  %s916, 3072, %s5, [#allocation4], 384, 384, 24
    $region29: #{tpu_custom_call.1} parent=1 // pred_fallthru
      _
    // Predicated region
    $region30: #{tpu_custom_call.1} parent=1 // pred_check
      _
    $region31: #{tpu_custom_call.1} parent=1 // pred_check_branch
      %923 = sbr.rel (0) target = $region33
    $region32: #{tpu_custom_call.1} parent=1 // pred_region
      %924 = dma.done [#allocation4], 3072
    $region33: #{tpu_custom_call.1} parent=1 // pred_fallthru
      _
    %925 = vsyncpa [#allocation3], 1
    %926 = vsyncpa [#allocation4], 1

</llo_original>
